<compile_context>
chip_gen: v5e
topology: v5e:2x2
jax: 0.10.0
libtpu: 0.0.40
codegen_flags: <defaults>
</compile_context>

<pallas_src>
import functools

import jax
import jax.numpy as jnp
from jax.experimental import pallas as pl
from jax.experimental.pallas import tpu as pltpu

LANE = 128       # TPU lane width; the tiny n_actions head is padded up to this.
_TILE_CAP = 1024 # rows per grid step: big enough to amortize ~0.35us/step,
                 # small enough (~1 MB f32 out tile, double-buffered) for any VMEM.


# --------------------------------------------------------------------------
# Kernels
# --------------------------------------------------------------------------
def _mlp_q(x_ref, w1_ref, b1_ref, w2_ref, b2_ref, w3_ref, b3_ref):
    """Shared MLP body -> f32 Q tile [tile_b, LANE] (padded cols are exactly 0)."""
    # In-kernel cast of x to the MXU dtype (saves a wrapper-side XLA pass).
    x = x_ref[...].astype(w1_ref.dtype)
    # Layer 1
    h1 = jnp.dot(x, w1_ref[...], preferred_element_type=jnp.float32)
    h1 = jnp.maximum(h1 + b1_ref[...], 0.0)          # f32 epilogue (v5e-safe)
    # Layer 2
    h2 = jnp.dot(h1.astype(w2_ref.dtype), w2_ref[...],
                 preferred_element_type=jnp.float32)
    h2 = jnp.maximum(h2 + b2_ref[...], 0.0)
    # Output head (W3/b3 zero-padded to LANE columns -> lane-dense store).
    q = jnp.dot(h2.astype(w3_ref.dtype), w3_ref[...],
                preferred_element_type=jnp.float32)
    return q + b3_ref[...]


def qnet_kernel(x_ref, w1_ref, b1_ref, w2_ref, b2_ref, w3_ref, b3_ref, out_ref):
    """Q-values kernel: Linear -> ReLU -> Linear -> ReLU -> Linear."""
    out_ref[...] = _mlp_q(x_ref, w1_ref, b1_ref, w2_ref, b2_ref,
                          w3_ref, b3_ref).astype(out_ref.dtype)


def qnet_act_kernel(n_actions, x_ref, w1_ref, b1_ref, w2_ref, b2_ref,
                    w3_ref, b3_ref, act_ref):
    """Fused greedy actor: int32 argmax_a Q(x, a) per row."""
    q = _mlp_q(x_ref, w1_ref, b1_ref, w2_ref, b2_ref, w3_ref, b3_ref)
    col = jax.lax.broadcasted_iota(jnp.int32, q.shape, 1)
    # Mask padded columns (which are exactly 0.0) to -inf BEFORE the argmax,
    # otherwise they would win whenever all real Q-values are negative.
    qm = jnp.where(col < n_actions, q, -jnp.inf)
    row_max = jnp.max(qm, axis=-1, keepdims=True)
    # First index achieving the max (matches jnp.argmax tie-breaking).
    idx = jnp.min(jnp.where(qm == row_max, col, LANE), axis=-1, keepdims=True)
    act_ref[...] = idx.astype(jnp.int32)


# --------------------------------------------------------------------------
# Wrappers
# --------------------------------------------------------------------------
def prepare_params(params, matmul_dtype=jnp.bfloat16):
    """One-time prep (call OUTSIDE the actor loop).

    Casts weights to the MXU dtype and zero-pads the output head to LANE
    columns so the kernel's final store is an unmasked, lane-dense vst.
    Biases stay f32 so the bias-add/ReLU epilogue is full precision on every
    TPU generation.
    """
    w3 = params["w3"].astype(matmul_dtype)
    b3 = params["b3"].astype(jnp.float32)
    h2, n_actions = w3.shape
    w3p = jnp.zeros((h2, LANE), matmul_dtype).at[:, :n_actions].set(w3)
    b3p = jnp.zeros((1, LANE), jnp.float32).at[:, :n_actions].set(b3)
    return {
        "w1": params["w1"].astype(matmul_dtype),
        "b1": params["b1"].astype(jnp.float32),
        "w2": params["w2"].astype(matmul_dtype),
        "b2": params["b2"].astype(jnp.float32),
        "w3": w3p,
        "b3": b3p,
    }


def _round_up(n, m):
    return ((n + m - 1) // m) * m


def _choose_tiling(B):
    """Returns (tile_b, n_tiles, padded_B)."""
    if B <= _TILE_CAP:
        tile_b = _round_up(max(B, 8), 8)     # single grid step
        return tile_b, 1, tile_b
    tile_b = _TILE_CAP
    n_tiles = -(-B // tile_b)
    if n_tiles % 2:                          # even tile count feeds both v7x TCs
        n_tiles += 1
    return tile_b, n_tiles, n_tiles * tile_b


def _in_specs(tile_b, obs, prepped):
    """x tile streams; weights/biases are VMEM-resident (constant index maps)."""
    def resident(a):
        nd = a.ndim
        return pl.BlockSpec(a.shape, lambda i, _nd=nd: (0,) * _nd)
    return [pl.BlockSpec((tile_b, obs), lambda i: (i, 0))] + [
        resident(prepped[k]) for k in ("w1", "b1", "w2", "b2", "w3", "b3")]


def _pad_batch(x, Bp):
    B, obs = x.shape
    if Bp == B:
        return x
    return jnp.zeros((Bp, obs), x.dtype).at[:B].set(x)


@functools.partial(jax.jit, static_argnames=("n_actions",))
def qnet_forward(x, prepped, *, n_actions):
    """x: [B, obs] f32, prepped = prepare_params(params).  Returns Q [B, n_actions] f32."""
    B, obs = x.shape
    tile_b, n_tiles, Bp = _choose_tiling(B)
    xp = _pad_batch(x, Bp)
    out = pl.pallas_call(
        qnet_kernel,
        out_shape=jax.ShapeDtypeStruct((Bp, LANE), jnp.float32),
        grid=(n_tiles,),
        in_specs=_in_specs(tile_b, obs, prepped),
        out_specs=pl.BlockSpec((tile_b, LANE), lambda i: (i, 0)),
        compiler_params=pltpu.CompilerParams(
            dimension_semantics=("parallel",)),     # megacore split on v7x
    )(xp, prepped["w1"], prepped["b1"], prepped["w2"], prepped["b2"],
      prepped["w3"], prepped["b3"])
    # Module-semantics return.  An RL actor loop should call qnet_act() below
    # instead, which fuses the argmax and avoids this extra slice dispatch.
    return out[:B, :n_actions]


@functools.partial(jax.jit, static_argnames=("n_actions",))
def qnet_act(x, prepped, *, n_actions):
    """Fused greedy actor: int32 actions [B] = argmax_a Q(x, a)."""
    B, obs = x.shape
    tile_b, n_tiles, Bp = _choose_tiling(B)
    xp = _pad_batch(x, Bp)
    acts = pl.pallas_call(
        functools.partial(qnet_act_kernel, n_actions),
        out_shape=jax.ShapeDtypeStruct((Bp, 1), jnp.int32),
        grid=(n_tiles,),
        in_specs=_in_specs(tile_b, obs, prepped),
        out_specs=pl.BlockSpec((tile_b, 1), lambda i: (i, 0)),
        compiler_params=pltpu.CompilerParams(
            dimension_semantics=("parallel",)),
    )(xp, prepped["w1"], prepped["b1"], prepped["w2"], prepped["b2"],
      prepped["w3"], prepped["b3"])
    return acts[:B, 0]


# --------------------------------------------------------------------------
# Init + pure-JAX reference
# --------------------------------------------------------------------------
def init_params(key, observation_size, n_actions, hidden_size=(128, 128)):
    """PyTorch-style uniform fan_in init; weights stored as [in, out]."""
    sizes = [observation_size] + list(hidden_size) + [n_actions]
    params = {}
    for i in range(len(sizes) - 1):
        fan_in, fan_out = sizes[i], sizes[i + 1]
        key, kw, kb = jax.random.split(key, 3)
        bound = 1.0 / (fan_in ** 0.5)
        params[f"w{i+1}"] = jax.random.uniform(
            kw, (fan_in, fan_out), jnp.float32, -bound, bound)
        params[f"b{i+1}"] = jax.random.uniform(
            kb, (1, fan_out), jnp.float32, -bound, bound)
    return params


def qnet_reference(x, params, matmul_dtype=jnp.float32):
    """Pure-JAX reference with the same matmul-operand casts as the kernel."""
    c = lambda a: a.astype(matmul_dtype)
    h = jnp.maximum(
        jnp.dot(c(x), c(params["w1"]), preferred_element_type=jnp.float32)
        + params["b1"], 0.0)
    h = jnp.maximum(
        jnp.dot(c(h), c(params["w2"]), preferred_element_type=jnp.float32)
        + params["b2"], 0.0)
    return (jnp.dot(c(h), c(params["w3"]), preferred_element_type=jnp.float32)
            + params["b3"])


if __name__ == "__main__":
    # Flappy Bird-like dims: small observation vector, 2 actions; batch is a
    # vectorized stack of environments.
    observation_size = 12
    n_actions = 2
    batch = 256

    key = jax.random.PRNGKey(0)
    key, kx = jax.random.split(key)
    x = jax.random.normal(kx, (batch, observation_size), dtype=jnp.float32)
    params = init_params(key, observation_size, n_actions)

    # One-time param prep (outside the per-call / actor-loop path).
    prep_f32 = prepare_params(params, matmul_dtype=jnp.float32)
    prep_bf16 = prepare_params(params, matmul_dtype=jnp.bfloat16)

    # Full-f32 path: tight check against the f32 reference.
    out_f32 = jax.block_until_ready(qnet_forward(x, prep_f32, n_actions=n_actions))
    ref_f32 = qnet_reference(x, params, matmul_dtype=jnp.float32)
    assert out_f32.shape == (batch, n_actions)
    assert jnp.allclose(out_f32, ref_f32, atol=1e-5, rtol=1e-5)

    # Default bf16-MXU path: check against a bf16-matched reference (loose),
    # plus a sanity check against full f32.
    out_bf16 = jax.block_until_ready(qnet_forward(x, prep_bf16, n_actions=n_actions))
    ref_bf16 = qnet_reference(x, params, matmul_dtype=jnp.bfloat16)
    assert out_bf16.shape == (batch, n_actions)
    assert jnp.allclose(out_bf16, ref_bf16, atol=2e-2, rtol=2e-2)
    assert jnp.allclose(out_bf16, ref_f32, atol=5e-2, rtol=5e-2)

    # Fused greedy actor: must agree exactly with argmax of the kernel's own
    # Q-values (same math path, padded columns masked to -inf in-kernel).
    acts = jax.block_until_ready(qnet_act(x, prep_f32, n_actions=n_actions))
    assert acts.shape == (batch,)
    assert acts.dtype == jnp.int32
    assert jnp.array_equal(acts, jnp.argmax(out_f32, axis=-1).astype(jnp.int32))

    print("KERNEL_OK")
</pallas_src>

<mosaic_0001>
module attributes {stable_mosaic.version = 11 : i64} {
  func.func @qnet_kernel(%arg0: i32, %arg1: memref<256x12xf32, #tpu.memory_space<vmem>>, %arg2: memref<12x128xf32, #tpu.memory_space<vmem>>, %arg3: memref<1x128xf32, #tpu.memory_space<vmem>>, %arg4: memref<128x128xf32, #tpu.memory_space<vmem>>, %arg5: memref<1x128xf32, #tpu.memory_space<vmem>>, %arg6: memref<128x128xf32, #tpu.memory_space<vmem>>, %arg7: memref<1x128xf32, #tpu.memory_space<vmem>>, %arg8: memref<256x128xf32, #tpu.memory_space<vmem>>) attributes {dimension_semantics = [#tpu.dimension_semantics<parallel>], iteration_bounds = array<i64: 1>, scalar_prefetch = 0 : i64, scratch_operands = 0 : i64, tpu.core_type = #tpu.core_type<tc>, window_params = [{transform_indices = @transform_0, window_bounds = array<i64: 256, 12>}, {pipeline_mode = #tpu.pipeline_mode<synchronous>, transform_indices = @transform_1, window_bounds = array<i64: 12, 128>}, {pipeline_mode = #tpu.pipeline_mode<synchronous>, transform_indices = @transform_2, window_bounds = array<i64: 1, 128>}, {pipeline_mode = #tpu.pipeline_mode<synchronous>, transform_indices = @transform_3, window_bounds = array<i64: 128, 128>}, {pipeline_mode = #tpu.pipeline_mode<synchronous>, transform_indices = @transform_4, window_bounds = array<i64: 1, 128>}, {pipeline_mode = #tpu.pipeline_mode<synchronous>, transform_indices = @transform_5, window_bounds = array<i64: 128, 128>}, {pipeline_mode = #tpu.pipeline_mode<synchronous>, transform_indices = @transform_6, window_bounds = array<i64: 1, 128>}, {transform_indices = @transform_7, window_bounds = array<i64: 256, 128>}]} {
    %c0 = arith.constant 0 : index
    %c0_0 = arith.constant 0 : index
    %0 = vector.load %arg1[%c0, %c0_0] : memref<256x12xf32, #tpu.memory_space<vmem>>, vector<256x12xf32>
    %c0_1 = arith.constant 0 : index
    %c0_2 = arith.constant 0 : index
    %1 = vector.load %arg2[%c0_1, %c0_2] : memref<12x128xf32, #tpu.memory_space<vmem>>, vector<12x128xf32>
    %cst = arith.constant dense<0.000000e+00> : vector<256x128xf32>
    %2 = tpu.matmul %0, %1, %cst {dimension_numbers = #tpu.dot_dimension_numbers<[1], [0], [0], [1], [0, 0, 1, 1], [], []>} : vector<256x12xf32>, vector<12x128xf32>, vector<256x128xf32> -> vector<256x128xf32>
    %c0_3 = arith.constant 0 : index
    %c0_4 = arith.constant 0 : index
    %3 = vector.load %arg3[%c0_3, %c0_4] : memref<1x128xf32, #tpu.memory_space<vmem>>, vector<1x128xf32>
    %4 = vector.broadcast %3 : vector<1x128xf32> to vector<256x128xf32>
    %5 = arith.addf %2, %4 : vector<256x128xf32>
    %cst_5 = arith.constant 0.000000e+00 : f32
    %6 = vector.broadcast %cst_5 : f32 to vector<256x128xf32>
    %7 = arith.maximumf %5, %6 : vector<256x128xf32>
    %c0_6 = arith.constant 0 : index
    %c0_7 = arith.constant 0 : index
    %8 = vector.load %arg4[%c0_6, %c0_7] : memref<128x128xf32, #tpu.memory_space<vmem>>, vector<128x128xf32>
    %cst_8 = arith.constant dense<0.000000e+00> : vector<256x128xf32>
    %9 = tpu.matmul %7, %8, %cst_8 {dimension_numbers = #tpu.dot_dimension_numbers<[1], [0], [0], [1], [0, 0, 1, 1], [], []>} : vector<256x128xf32>, vector<128x128xf32>, vector<256x128xf32> -> vector<256x128xf32>
    %c0_9 = arith.constant 0 : index
    %c0_10 = arith.constant 0 : index
    %10 = vector.load %arg5[%c0_9, %c0_10] : memref<1x128xf32, #tpu.memory_space<vmem>>, vector<1x128xf32>
    %11 = vector.broadcast %10 : vector<1x128xf32> to vector<256x128xf32>
    %12 = arith.addf %9, %11 : vector<256x128xf32>
    %cst_11 = arith.constant 0.000000e+00 : f32
    %13 = vector.broadcast %cst_11 : f32 to vector<256x128xf32>
    %14 = arith.maximumf %12, %13 : vector<256x128xf32>
    %c0_12 = arith.constant 0 : index
    %c0_13 = arith.constant 0 : index
    %15 = vector.load %arg6[%c0_12, %c0_13] : memref<128x128xf32, #tpu.memory_space<vmem>>, vector<128x128xf32>
    %cst_14 = arith.constant dense<0.000000e+00> : vector<256x128xf32>
    %16 = tpu.matmul %14, %15, %cst_14 {dimension_numbers = #tpu.dot_dimension_numbers<[1], [0], [0], [1], [0, 0, 1, 1], [], []>} : vector<256x128xf32>, vector<128x128xf32>, vector<256x128xf32> -> vector<256x128xf32>
    %c0_15 = arith.constant 0 : index
    %c0_16 = arith.constant 0 : index
    %17 = vector.load %arg7[%c0_15, %c0_16] : memref<1x128xf32, #tpu.memory_space<vmem>>, vector<1x128xf32>
    %18 = vector.broadcast %17 : vector<1x128xf32> to vector<256x128xf32>
    %19 = arith.addf %16, %18 : vector<256x128xf32>
    %c0_17 = arith.constant 0 : index
    %c0_18 = arith.constant 0 : index
    %20 = vector.load %arg8[%c0_17, %c0_18] : memref<256x128xf32, #tpu.memory_space<vmem>>, vector<256x128xf32>
    tpu.vector_store %arg8[%c0_17, %c0_18], %19 {strides = array<i32>} : memref<256x128xf32, #tpu.memory_space<vmem>>, vector<256x128xf32>,
    return
  }
  func.func @transform_0(%arg0: i32) -> (i32, i32) {
    %c0_i32 = arith.constant 0 : i32
    %c0_i32_0 = arith.constant 0 : i32
    return %arg0, %c0_i32 : i32, i32
  }
  func.func @transform_1(%arg0: i32) -> (i32, i32) {
    %c0_i32 = arith.constant 0 : i32
    %c0_i32_0 = arith.constant 0 : i32
    %c0_i32_1 = arith.constant 0 : i32
    return %c0_i32, %c0_i32_0 : i32, i32
  }
  func.func @transform_2(%arg0: i32) -> (i32, i32) {
    %c0_i32 = arith.constant 0 : i32
    %c0_i32_0 = arith.constant 0 : i32
    %c0_i32_1 = arith.constant 0 : i32
    return %c0_i32, %c0_i32_0 : i32, i32
  }
  func.func @transform_3(%arg0: i32) -> (i32, i32) {
    %c0_i32 = arith.constant 0 : i32
    %c0_i32_0 = arith.constant 0 : i32
    %c0_i32_1 = arith.constant 0 : i32
    return %c0_i32, %c0_i32_0 : i32, i32
  }
  func.func @transform_4(%arg0: i32) -> (i32, i32) {
    %c0_i32 = arith.constant 0 : i32
    %c0_i32_0 = arith.constant 0 : i32
    %c0_i32_1 = arith.constant 0 : i32
    return %c0_i32, %c0_i32_0 : i32, i32
  }
  func.func @transform_5(%arg0: i32) -> (i32, i32) {
    %c0_i32 = arith.constant 0 : i32
    %c0_i32_0 = arith.constant 0 : i32
    %c0_i32_1 = arith.constant 0 : i32
    return %c0_i32, %c0_i32_0 : i32, i32
  }
  func.func @transform_6(%arg0: i32) -> (i32, i32) {
    %c0_i32 = arith.constant 0 : i32
    %c0_i32_0 = arith.constant 0 : i32
    %c0_i32_1 = arith.constant 0 : i32
    return %c0_i32, %c0_i32_0 : i32, i32
  }
  func.func @transform_7(%arg0: i32) -> (i32, i32) {
    %c0_i32 = arith.constant 0 : i32
    %c0_i32_0 = arith.constant 0 : i32
    return %arg0, %c0_i32 : i32, i32
  }
}

</mosaic_0001>

<llo_original>
// kernel: qnet_forward.1
$region0: #{qnet_forward.1}
  #allocation0 [shape = 'u32[]', space=smem, size = 0x4, offset = 0x4, fixed_abs, tag = 'smem constant byte address 0x4 - core index']
  #allocation1 [shape = 'u32[72,128]{1,0:T(1,128)}', space=vmem, size = 0x9000, scoped, tag = 'internal scratch']
  %s0 = inlined_call_operand.vmem [shape: f32[256,12], index: 0, kind: input, shape index: {}]
  %s1 = inlined_call_operand.vmem [shape: f32[12,128], index: 1, kind: input, shape index: {}]
  %s2 = inlined_call_operand.vmem [shape: f32[1,128], index: 2, kind: input, shape index: {}]
  %s3 = inlined_call_operand.vmem [shape: f32[128,128], index: 3, kind: input, shape index: {}]
  %s4 = inlined_call_operand.vmem [shape: f32[1,128], index: 4, kind: input, shape index: {}]
  %s5 = inlined_call_operand.vmem [shape: f32[128,128], index: 5, kind: input, shape index: {}]
  %s6 = inlined_call_operand.vmem [shape: f32[1,128], index: 6, kind: input, shape index: {}]
  %s7 = inlined_call_operand.vmem [shape: f32[256,128], index: 7, kind: output, shape index: {}]
  %s8 = sld [smem:[#allocation0]]
  $region38: #{qnet_forward.1} parent=0
    _
  %s10 = ssub.s32 1, %s8
  %s11 = scalar_select 0, %s10, %s8
  // Predicated region
  $region2: #{qnet_forward.1} parent=0 // pred_check
    _
  $region3: #{qnet_forward.1} parent=0 // pred_check_branch
    %13 = sbr.rel (0) target = $region5
  $region4: #{qnet_forward.1} parent=0 // pred_region
    _
  $region5: #{qnet_forward.1} parent=0 // pred_fallthru
    _
  // Predicated region
  $region6: #{qnet_forward.1} parent=0 // pred_check
    _
  $region7: #{qnet_forward.1} parent=0 // pred_check_branch
    %15 = sbr.rel (0) target = $region9
  $region8: #{qnet_forward.1} parent=0 // pred_region
    _
  $region9: #{qnet_forward.1} parent=0 // pred_fallthru
    _
  // Predicated region
  $region10: #{qnet_forward.1} parent=0 // pred_check
    _
  $region11: #{qnet_forward.1} parent=0 // pred_check_branch
    %17 = sbr.rel (0) target = $region13
  $region12: #{qnet_forward.1} parent=0 // pred_region
    _
  $region13: #{qnet_forward.1} parent=0 // pred_fallthru
    _
  // Predicated region
  $region14: #{qnet_forward.1} parent=0 // pred_check
    _
  $region15: #{qnet_forward.1} parent=0 // pred_check_branch
    %19 = sbr.rel (0) target = $region17
  $region16: #{qnet_forward.1} parent=0 // pred_region
    _
  $region17: #{qnet_forward.1} parent=0 // pred_fallthru
    _
  // Predicated region
  $region18: #{qnet_forward.1} parent=0 // pred_check
    _
  $region19: #{qnet_forward.1} parent=0 // pred_check_branch
    %21 = sbr.rel (0) target = $region21
  $region20: #{qnet_forward.1} parent=0 // pred_region
    _
  $region21: #{qnet_forward.1} parent=0 // pred_fallthru
    _
  // Predicated region
  $region22: #{qnet_forward.1} parent=0 // pred_check
    _
  $region23: #{qnet_forward.1} parent=0 // pred_check_branch
    %23 = sbr.rel (0) target = $region25
  $region24: #{qnet_forward.1} parent=0 // pred_region
    _
  $region25: #{qnet_forward.1} parent=0 // pred_fallthru
    _
  // Predicated region
  $region26: #{qnet_forward.1} parent=0 // pred_check
    _
  $region27: #{qnet_forward.1} parent=0 // pred_check_branch
    %25 = sbr.rel (0) target = $region29
  $region28: #{qnet_forward.1} parent=0 // pred_region
    _
  $region29: #{qnet_forward.1} parent=0 // pred_fallthru
    _
  %v26 = vld [vmem:[%s0] sm:$0xff]
  %v27 = vld [vmem:[%s0 + $0x8] sm:$0xff]
  %v28 = vld [vmem:[%s0 + $0x10] sm:$0xff]
  %v29 = vld [vmem:[%s0 + $0x18] sm:$0xff]
  %v30 = vld [vmem:[%s0 + $0x20] sm:$0xff]
  %v31 = vld [vmem:[%s0 + $0x28] sm:$0xff]
  %v32 = vld [vmem:[%s0 + $0x30] sm:$0xff]
  %v33 = vld [vmem:[%s0 + $0x38] sm:$0xff]
  %v34 = vld [vmem:[%s0 + $0x40] sm:$0xff]
  %v35 = vld [vmem:[%s0 + $0x48] sm:$0xff]
  %v36 = vld [vmem:[%s0 + $0x50] sm:$0xff]
  %v37 = vld [vmem:[%s0 + $0x58] sm:$0xff]
  %v38 = vld [vmem:[%s0 + $0x60] sm:$0xff]
  %v39 = vld [vmem:[%s0 + $0x68] sm:$0xff]
  %v40 = vld [vmem:[%s0 + $0x70] sm:$0xff]
  %v41 = vld [vmem:[%s0 + $0x78] sm:$0xff]
  %v42 = vld [vmem:[%s0 + $0x80] sm:$0xff]
  %v43 = vld [vmem:[%s0 + $0x88] sm:$0xff]
  %v44 = vld [vmem:[%s0 + $0x90] sm:$0xff]
  %v45 = vld [vmem:[%s0 + $0x98] sm:$0xff]
  %v46 = vld [vmem:[%s0 + $0xa0] sm:$0xff]
  %v47 = vld [vmem:[%s0 + $0xa8] sm:$0xff]
  %v48 = vld [vmem:[%s0 + $0xb0] sm:$0xff]
  %v49 = vld [vmem:[%s0 + $0xb8] sm:$0xff]
  %v50 = vld [vmem:[%s0 + $0xc0] sm:$0xff]
  %v51 = vld [vmem:[%s0 + $0xc8] sm:$0xff]
  %v52 = vld [vmem:[%s0 + $0xd0] sm:$0xff]
  %v53 = vld [vmem:[%s0 + $0xd8] sm:$0xff]
  %v54 = vld [vmem:[%s0 + $0xe0] sm:$0xff]
  %v55 = vld [vmem:[%s0 + $0xe8] sm:$0xff]
  %v56 = vld [vmem:[%s0 + $0xf0] sm:$0xff]
  %v57 = vld [vmem:[%s0 + $0xf8] sm:$0xff]
  %v58 = vld [vmem:[%s1] sm:$0xff]
  %v59 = vld [vmem:[%s1 + $0x8] sm:$0xf]
  %v60 = vld [vmem:[%s2] sm:$0x1]
  %v62 = vperm.slane %v60, 0
  %vm64 = vcmask 97280
  %v66 = vsel %vm64, %v26, 0
  %v69 = vsel %vm64, %v27, 0
  %v72 = vsel %vm64, %v28, 0
  %v75 = vsel %vm64, %v29, 0
  %v78 = vsel %vm64, %v30, 0
  %v81 = vsel %vm64, %v31, 0
  %v84 = vsel %vm64, %v32, 0
  %v87 = vsel %vm64, %v33, 0
  %v90 = vsel %vm64, %v34, 0
  %v93 = vsel %vm64, %v35, 0
  %v96 = vsel %vm64, %v36, 0
  %v99 = vsel %vm64, %v37, 0
  %v102 = vsel %vm64, %v38, 0
  %v105 = vsel %vm64, %v39, 0
  %v108 = vsel %vm64, %v40, 0
  %v111 = vsel %vm64, %v41, 0
  %v114 = vsel %vm64, %v42, 0
  %v117 = vsel %vm64, %v43, 0
  %v120 = vsel %vm64, %v44, 0
  %v123 = vsel %vm64, %v45, 0
  %v126 = vsel %vm64, %v46, 0
  %v129 = vsel %vm64, %v47, 0
  %v132 = vsel %vm64, %v48, 0
  %v135 = vsel %vm64, %v49, 0
  %v138 = vsel %vm64, %v50, 0
  %v141 = vsel %vm64, %v51, 0
  %v144 = vsel %vm64, %v52, 0
  %v147 = vsel %vm64, %v53, 0
  %v150 = vsel %vm64, %v54, 0
  %v153 = vsel %vm64, %v55, 0
  %v156 = vsel %vm64, %v56, 0
  %v159 = vsel %vm64, %v57, 0
  %vm161 = vcmask 1043456
  %v163 = vsel %vm161, %v59, 0
  %165 = vmatpush.msra.mxu0 0.0
  %166 = vmatpush.msra.mxu0 0.0
  %167 = vmatpush.msra.mxu0 0.0
  %168 = vmatpush.msra.mxu0 0.0
  %169 = vmatpush.msra.mxu0 0.0
  %170 = vmatpush.msra.mxu0 0.0
  %171 = vmatpush.msra.mxu0 0.0
  %172 = vmatpush.msra.mxu0 0.0
  %173 = vmatpush.msra.mxu0 0.0
  %174 = vmatpush.msra.mxu0 0.0
  %175 = vmatpush.msra.mxu0 0.0
  %176 = vmatpush.msra.mxu0 0.0
  %177 = vmatpush.msra.mxu0 0.0
  %178 = vmatpush.msra.mxu0 0.0
  %179 = vmatpush.msra.mxu0 %v163
  %180 = vmatpush.msra.mxu0 %v58
  %181 = vmatmul.f32.gmra.mxu0 %v66
  %v182 = vpop.f32.mrf.mxu0
  %v183 = vadd.f32 %v62, %v182
  %184 = vmatmul.f32.gmra.mxu0 %v69
  %v185 = vpop.f32.mrf.mxu0
  %v186 = vadd.f32 %v62, %v185
  %187 = vmatmul.f32.gmra.mxu0 %v72
  %v188 = vpop.f32.mrf.mxu0
  %v189 = vadd.f32 %v62, %v188
  %190 = vmatmul.f32.gmra.mxu0 %v75
  %v191 = vpop.f32.mrf.mxu0
  %v192 = vadd.f32 %v62, %v191
  %193 = vmatmul.f32.gmra.mxu0 %v78
  %v194 = vpop.f32.mrf.mxu0
  %v195 = vadd.f32 %v62, %v194
  %196 = vmatmul.f32.gmra.mxu0 %v81
  %v197 = vpop.f32.mrf.mxu0
  %v198 = vadd.f32 %v62, %v197
  %199 = vmatmul.f32.gmra.mxu0 %v84
  %v200 = vpop.f32.mrf.mxu0
  %v201 = vadd.f32 %v62, %v200
  %202 = vmatmul.f32.gmra.mxu0 %v87
  %v203 = vpop.f32.mrf.mxu0
  %v204 = vadd.f32 %v62, %v203
  %205 = vmatmul.f32.gmra.mxu0 %v90
  %v206 = vpop.f32.mrf.mxu0
  %v207 = vadd.f32 %v62, %v206
  %208 = vmatmul.f32.gmra.mxu0 %v93
  %v209 = vpop.f32.mrf.mxu0
  %v210 = vadd.f32 %v62, %v209
  %211 = vmatmul.f32.gmra.mxu0 %v96
  %v212 = vpop.f32.mrf.mxu0
  %v213 = vadd.f32 %v62, %v212
  %214 = vmatmul.f32.gmra.mxu0 %v99
  %v215 = vpop.f32.mrf.mxu0
  %v216 = vadd.f32 %v62, %v215
  %217 = vmatmul.f32.gmra.mxu0 %v102
  %v218 = vpop.f32.mrf.mxu0
  %v219 = vadd.f32 %v62, %v218
  %220 = vmatmul.f32.gmra.mxu0 %v105
  %v221 = vpop.f32.mrf.mxu0
  %v222 = vadd.f32 %v62, %v221
  %223 = vmatmul.f32.gmra.mxu0 %v108
  %v224 = vpop.f32.mrf.mxu0
  %v225 = vadd.f32 %v62, %v224
  %226 = vmatmul.f32.gmra.mxu0 %v111
  %v227 = vpop.f32.mrf.mxu0
  %v228 = vadd.f32 %v62, %v227
  %229 = vmatmul.f32.gmra.mxu0 %v114
  %v230 = vpop.f32.mrf.mxu0
  %v231 = vadd.f32 %v62, %v230
  %232 = vmatmul.f32.gmra.mxu0 %v117
  %v233 = vpop.f32.mrf.mxu0
  %v234 = vadd.f32 %v62, %v233
  %235 = vmatmul.f32.gmra.mxu0 %v120
  %v236 = vpop.f32.mrf.mxu0
  %v237 = vadd.f32 %v62, %v236
  %238 = vmatmul.f32.gmra.mxu0 %v123
  %v239 = vpop.f32.mrf.mxu0
  %v240 = vadd.f32 %v62, %v239
  %241 = vmatmul.f32.gmra.mxu0 %v126
  %v242 = vpop.f32.mrf.mxu0
  %v243 = vadd.f32 %v62, %v242
  %244 = vmatmul.f32.gmra.mxu0 %v129
  %v245 = vpop.f32.mrf.mxu0
  %v246 = vadd.f32 %v62, %v245
  %247 = vmatmul.f32.gmra.mxu0 %v132
  %v248 = vpop.f32.mrf.mxu0
  %v249 = vadd.f32 %v62, %v248
  %250 = vmatmul.f32.gmra.mxu0 %v135
  %v251 = vpop.f32.mrf.mxu0
  %v252 = vadd.f32 %v62, %v251
  %253 = vmatmul.f32.gmra.mxu0 %v138
  %v254 = vpop.f32.mrf.mxu0
  %v255 = vadd.f32 %v62, %v254
  %256 = vmatmul.f32.gmra.mxu0 %v141
  %v257 = vpop.f32.mrf.mxu0
  %v258 = vadd.f32 %v62, %v257
  %259 = vmatmul.f32.gmra.mxu0 %v144
  %v260 = vpop.f32.mrf.mxu0
  %v261 = vadd.f32 %v62, %v260
  %262 = vmatmul.f32.gmra.mxu0 %v147
  %v263 = vpop.f32.mrf.mxu0
  %v264 = vadd.f32 %v62, %v263
  %265 = vmatmul.f32.gmra.mxu0 %v150
  %v266 = vpop.f32.mrf.mxu0
  %v267 = vadd.f32 %v62, %v266
  %268 = vmatmul.f32.gmra.mxu0 %v153
  %v269 = vpop.f32.mrf.mxu0
  %v270 = vadd.f32 %v62, %v269
  %271 = vmatmul.f32.gmra.mxu0 %v156
  %v272 = vpop.f32.mrf.mxu0
  %v273 = vadd.f32 %v62, %v272
  %274 = vmatmul.f32.gmra.mxu0 %v159
  %v275 = vpop.f32.mrf.mxu0
  %v276 = vadd.f32 %v62, %v275
  %277 = vdwg.mxu0
  %v278 = vmax.f32 %v183, 0.0
  %v279 = vmax.f32 %v186, 0.0
  %v280 = vmax.f32 %v189, 0.0
  %v281 = vmax.f32 %v192, 0.0
  %v282 = vmax.f32 %v195, 0.0
  %v283 = vmax.f32 %v198, 0.0
  %v284 = vmax.f32 %v201, 0.0
  %v285 = vmax.f32 %v204, 0.0
  %v286 = vmax.f32 %v207, 0.0
  %v287 = vmax.f32 %v210, 0.0
  %v288 = vmax.f32 %v213, 0.0
  %v289 = vmax.f32 %v216, 0.0
  %v290 = vmax.f32 %v219, 0.0
  %v291 = vmax.f32 %v222, 0.0
  %v292 = vmax.f32 %v225, 0.0
  %v293 = vmax.f32 %v228, 0.0
  %v294 = vmax.f32 %v231, 0.0
  %v295 = vmax.f32 %v234, 0.0
  %v296 = vmax.f32 %v237, 0.0
  %v297 = vmax.f32 %v240, 0.0
  %v298 = vmax.f32 %v243, 0.0
  %v299 = vmax.f32 %v246, 0.0
  %v300 = vmax.f32 %v249, 0.0
  %v301 = vmax.f32 %v252, 0.0
  %v302 = vmax.f32 %v255, 0.0
  %v303 = vmax.f32 %v258, 0.0
  %v304 = vmax.f32 %v261, 0.0
  %v305 = vmax.f32 %v264, 0.0
  %v306 = vmax.f32 %v267, 0.0
  %v307 = vmax.f32 %v270, 0.0
  %v308 = vmax.f32 %v273, 0.0
  %v309 = vmax.f32 %v276, 0.0
  %v310 = vld [vmem:[%s3] sm:$0xff]
  %v311 = vld [vmem:[%s3 + $0x8] sm:$0xff]
  %v312 = vld [vmem:[%s3 + $0x10] sm:$0xff]
  %v313 = vld [vmem:[%s3 + $0x18] sm:$0xff]
  %v314 = vld [vmem:[%s3 + $0x20] sm:$0xff]
  %v315 = vld [vmem:[%s3 + $0x28] sm:$0xff]
  %v316 = vld [vmem:[%s3 + $0x30] sm:$0xff]
  %v317 = vld [vmem:[%s3 + $0x38] sm:$0xff]
  %v318 = vld [vmem:[%s3 + $0x40] sm:$0xff]
  %v319 = vld [vmem:[%s3 + $0x48] sm:$0xff]
  %v320 = vld [vmem:[%s3 + $0x50] sm:$0xff]
  %v321 = vld [vmem:[%s3 + $0x58] sm:$0xff]
  %v322 = vld [vmem:[%s3 + $0x60] sm:$0xff]
  %v323 = vld [vmem:[%s3 + $0x68] sm:$0xff]
  %v324 = vld [vmem:[%s3 + $0x70] sm:$0xff]
  %v325 = vld [vmem:[%s3 + $0x78] sm:$0xff]
  %v326 = vld [vmem:[%s4] sm:$0x1]
  %v328 = vperm.slane %v326, 0
  %330 = vmatpush.msra.mxu0 %v325
  %331 = vmatpush.msra.mxu0 %v324
  %332 = vmatpush.msra.mxu0 %v323
  %333 = vmatpush.msra.mxu0 %v322
  %334 = vmatpush.msra.mxu0 %v321
  %335 = vmatpush.msra.mxu0 %v320
  %336 = vmatpush.msra.mxu0 %v319
  %337 = vmatpush.msra.mxu0 %v318
  %338 = vmatpush.msra.mxu0 %v317
  %339 = vmatpush.msra.mxu0 %v316
  %340 = vmatpush.msra.mxu0 %v315
  %341 = vmatpush.msra.mxu0 %v314
  %342 = vmatpush.msra.mxu0 %v313
  %343 = vmatpush.msra.mxu0 %v312
  %344 = vmatpush.msra.mxu0 %v311
  %345 = vmatpush.msra.mxu0 %v310
  %346 = vmatmul.f32.gmra.mxu0 %v278
  %v347 = vpop.f32.mrf.mxu0
  %v348 = vadd.f32 %v328, %v347
  %349 = vmatmul.f32.gmra.mxu0 %v279
  %v350 = vpop.f32.mrf.mxu0
  %v351 = vadd.f32 %v328, %v350
  %352 = vmatmul.f32.gmra.mxu0 %v280
  %v353 = vpop.f32.mrf.mxu0
  %v354 = vadd.f32 %v328, %v353
  %355 = vmatmul.f32.gmra.mxu0 %v281
  %v356 = vpop.f32.mrf.mxu0
  %v357 = vadd.f32 %v328, %v356
  %358 = vmatmul.f32.gmra.mxu0 %v282
  %v359 = vpop.f32.mrf.mxu0
  %v360 = vadd.f32 %v328, %v359
  %361 = vmatmul.f32.gmra.mxu0 %v283
  %v362 = vpop.f32.mrf.mxu0
  %v363 = vadd.f32 %v328, %v362
  %364 = vmatmul.f32.gmra.mxu0 %v284
  %v365 = vpop.f32.mrf.mxu0
  %v366 = vadd.f32 %v328, %v365
  %367 = vmatmul.f32.gmra.mxu0 %v285
  %v368 = vpop.f32.mrf.mxu0
  %v369 = vadd.f32 %v328, %v368
  %370 = vmatmul.f32.gmra.mxu0 %v286
  %v371 = vpop.f32.mrf.mxu0
  %v372 = vadd.f32 %v328, %v371
  %373 = vmatmul.f32.gmra.mxu0 %v287
  %v374 = vpop.f32.mrf.mxu0
  %v375 = vadd.f32 %v328, %v374
  %376 = vmatmul.f32.gmra.mxu0 %v288
  %v377 = vpop.f32.mrf.mxu0
  %v378 = vadd.f32 %v328, %v377
  %379 = vmatmul.f32.gmra.mxu0 %v289
  %v380 = vpop.f32.mrf.mxu0
  %v381 = vadd.f32 %v328, %v380
  %382 = vmatmul.f32.gmra.mxu0 %v290
  %v383 = vpop.f32.mrf.mxu0
  %v384 = vadd.f32 %v328, %v383
  %385 = vmatmul.f32.gmra.mxu0 %v291
  %v386 = vpop.f32.mrf.mxu0
  %v387 = vadd.f32 %v328, %v386
  %388 = vmatmul.f32.gmra.mxu0 %v292
  %v389 = vpop.f32.mrf.mxu0
  %v390 = vadd.f32 %v328, %v389
  %391 = vmatmul.f32.gmra.mxu0 %v293
  %v392 = vpop.f32.mrf.mxu0
  %v393 = vadd.f32 %v328, %v392
  %394 = vmatmul.f32.gmra.mxu0 %v294
  %v395 = vpop.f32.mrf.mxu0
  %v396 = vadd.f32 %v328, %v395
  %397 = vmatmul.f32.gmra.mxu0 %v295
  %v398 = vpop.f32.mrf.mxu0
  %v399 = vadd.f32 %v328, %v398
  %400 = vmatmul.f32.gmra.mxu0 %v296
  %v401 = vpop.f32.mrf.mxu0
  %v402 = vadd.f32 %v328, %v401
  %403 = vmatmul.f32.gmra.mxu0 %v297
  %v404 = vpop.f32.mrf.mxu0
  %v405 = vadd.f32 %v328, %v404
  %406 = vmatmul.f32.gmra.mxu0 %v298
  %v407 = vpop.f32.mrf.mxu0
  %v408 = vadd.f32 %v328, %v407
  %409 = vmatmul.f32.gmra.mxu0 %v299
  %v410 = vpop.f32.mrf.mxu0
  %v411 = vadd.f32 %v328, %v410
  %412 = vmatmul.f32.gmra.mxu0 %v300
  %v413 = vpop.f32.mrf.mxu0
  %v414 = vadd.f32 %v328, %v413
  %415 = vmatmul.f32.gmra.mxu0 %v301
  %v416 = vpop.f32.mrf.mxu0
  %v417 = vadd.f32 %v328, %v416
  %418 = vmatmul.f32.gmra.mxu0 %v302
  %v419 = vpop.f32.mrf.mxu0
  %v420 = vadd.f32 %v328, %v419
  %421 = vmatmul.f32.gmra.mxu0 %v303
  %v422 = vpop.f32.mrf.mxu0
  %v423 = vadd.f32 %v328, %v422
  %424 = vmatmul.f32.gmra.mxu0 %v304
  %v425 = vpop.f32.mrf.mxu0
  %v426 = vadd.f32 %v328, %v425
  %427 = vmatmul.f32.gmra.mxu0 %v305
  %v428 = vpop.f32.mrf.mxu0
  %v429 = vadd.f32 %v328, %v428
  %430 = vmatmul.f32.gmra.mxu0 %v306
  %v431 = vpop.f32.mrf.mxu0
  %v432 = vadd.f32 %v328, %v431
  %433 = vmatmul.f32.gmra.mxu0 %v307
  %v434 = vpop.f32.mrf.mxu0
  %v435 = vadd.f32 %v328, %v434
  %436 = vmatmul.f32.gmra.mxu0 %v308
  %v437 = vpop.f32.mrf.mxu0
  %v438 = vadd.f32 %v328, %v437
  %439 = vmatmul.f32.gmra.mxu0 %v309
  %v440 = vpop.f32.mrf.mxu0
  %v441 = vadd.f32 %v328, %v440
  %442 = vdwg.mxu0
  %v443 = vmax.f32 %v348, 0.0
  %v444 = vmax.f32 %v351, 0.0
  %v445 = vmax.f32 %v354, 0.0
  %v446 = vmax.f32 %v357, 0.0
  %v447 = vmax.f32 %v360, 0.0
  %v448 = vmax.f32 %v363, 0.0
  %v449 = vmax.f32 %v366, 0.0
  %v450 = vmax.f32 %v369, 0.0
  %v451 = vmax.f32 %v372, 0.0
  %v452 = vmax.f32 %v375, 0.0
  %v453 = vmax.f32 %v378, 0.0
  %v454 = vmax.f32 %v381, 0.0
  %v455 = vmax.f32 %v384, 0.0
  %v456 = vmax.f32 %v387, 0.0
  %v457 = vmax.f32 %v390, 0.0
  %v458 = vmax.f32 %v393, 0.0
  %v459 = vmax.f32 %v396, 0.0
  %v460 = vmax.f32 %v399, 0.0
  %v461 = vmax.f32 %v402, 0.0
  %v462 = vmax.f32 %v405, 0.0
  %v463 = vmax.f32 %v408, 0.0
  %v464 = vmax.f32 %v411, 0.0
  %v465 = vmax.f32 %v414, 0.0
  %v466 = vmax.f32 %v417, 0.0
  %v467 = vmax.f32 %v420, 0.0
  %v468 = vmax.f32 %v423, 0.0
  %v469 = vmax.f32 %v426, 0.0
  %v470 = vmax.f32 %v429, 0.0
  %v471 = vmax.f32 %v432, 0.0
  %v472 = vmax.f32 %v435, 0.0
  %v473 = vmax.f32 %v438, 0.0
  %v474 = vmax.f32 %v441, 0.0
  %v475 = vld [vmem:[%s5] sm:$0xff]
  %v476 = vld [vmem:[%s5 + $0x8] sm:$0xff]
  %v477 = vld [vmem:[%s5 + $0x10] sm:$0xff]
  %v478 = vld [vmem:[%s5 + $0x18] sm:$0xff]
  %v479 = vld [vmem:[%s5 + $0x20] sm:$0xff]
  %v480 = vld [vmem:[%s5 + $0x28] sm:$0xff]
  %v481 = vld [vmem:[%s5 + $0x30] sm:$0xff]
  %v482 = vld [vmem:[%s5 + $0x38] sm:$0xff]
  %v483 = vld [vmem:[%s5 + $0x40] sm:$0xff]
  %v484 = vld [vmem:[%s5 + $0x48] sm:$0xff]
  %v485 = vld [vmem:[%s5 + $0x50] sm:$0xff]
  %v486 = vld [vmem:[%s5 + $0x58] sm:$0xff]
  %v487 = vld [vmem:[%s5 + $0x60] sm:$0xff]
  %v488 = vld [vmem:[%s5 + $0x68] sm:$0xff]
  %v489 = vld [vmem:[%s5 + $0x70] sm:$0xff]
  %v490 = vld [vmem:[%s5 + $0x78] sm:$0xff]
  %v491 = vld [vmem:[%s6] sm:$0x1]
  %v493 = vperm.slane %v491, 0
  %495 = vmatpush.msra.mxu0 %v490
  %496 = vmatpush.msra.mxu0 %v489
  %497 = vmatpush.msra.mxu0 %v488
  %498 = vmatpush.msra.mxu0 %v487
  %499 = vmatpush.msra.mxu0 %v486
  %500 = vmatpush.msra.mxu0 %v485
  %501 = vmatpush.msra.mxu0 %v484
  %502 = vmatpush.msra.mxu0 %v483
  %503 = vmatpush.msra.mxu0 %v482
  %504 = vmatpush.msra.mxu0 %v481
  %505 = vmatpush.msra.mxu0 %v480
  %506 = vmatpush.msra.mxu0 %v479
  %507 = vmatpush.msra.mxu0 %v478
  %508 = vmatpush.msra.mxu0 %v477
  %509 = vmatpush.msra.mxu0 %v476
  %510 = vmatpush.msra.mxu0 %v475
  %511 = vmatmul.f32.gmra.mxu0 %v443
  %v512 = vpop.f32.mrf.mxu0
  %v513 = vadd.f32 %v493, %v512
  %514 = vmatmul.f32.gmra.mxu0 %v444
  %v515 = vpop.f32.mrf.mxu0
  %v516 = vadd.f32 %v493, %v515
  %517 = vmatmul.f32.gmra.mxu0 %v445
  %v518 = vpop.f32.mrf.mxu0
  %v519 = vadd.f32 %v493, %v518
  %520 = vmatmul.f32.gmra.mxu0 %v446
  %v521 = vpop.f32.mrf.mxu0
  %v522 = vadd.f32 %v493, %v521
  %523 = vmatmul.f32.gmra.mxu0 %v447
  %v524 = vpop.f32.mrf.mxu0
  %v525 = vadd.f32 %v493, %v524
  %526 = vmatmul.f32.gmra.mxu0 %v448
  %v527 = vpop.f32.mrf.mxu0
  %v528 = vadd.f32 %v493, %v527
  %529 = vmatmul.f32.gmra.mxu0 %v449
  %v530 = vpop.f32.mrf.mxu0
  %v531 = vadd.f32 %v493, %v530
  %532 = vmatmul.f32.gmra.mxu0 %v450
  %v533 = vpop.f32.mrf.mxu0
  %v534 = vadd.f32 %v493, %v533
  %535 = vmatmul.f32.gmra.mxu0 %v451
  %v536 = vpop.f32.mrf.mxu0
  %v537 = vadd.f32 %v493, %v536
  %538 = vmatmul.f32.gmra.mxu0 %v452
  %v539 = vpop.f32.mrf.mxu0
  %v540 = vadd.f32 %v493, %v539
  %541 = vmatmul.f32.gmra.mxu0 %v453
  %v542 = vpop.f32.mrf.mxu0
  %v543 = vadd.f32 %v493, %v542
  %544 = vmatmul.f32.gmra.mxu0 %v454
  %v545 = vpop.f32.mrf.mxu0
  %v546 = vadd.f32 %v493, %v545
  %547 = vmatmul.f32.gmra.mxu0 %v455
  %v548 = vpop.f32.mrf.mxu0
  %v549 = vadd.f32 %v493, %v548
  %550 = vmatmul.f32.gmra.mxu0 %v456
  %v551 = vpop.f32.mrf.mxu0
  %v552 = vadd.f32 %v493, %v551
  %553 = vmatmul.f32.gmra.mxu0 %v457
  %v554 = vpop.f32.mrf.mxu0
  %v555 = vadd.f32 %v493, %v554
  %556 = vmatmul.f32.gmra.mxu0 %v458
  %v557 = vpop.f32.mrf.mxu0
  %v558 = vadd.f32 %v493, %v557
  %559 = vmatmul.f32.gmra.mxu0 %v459
  %v560 = vpop.f32.mrf.mxu0
  %v561 = vadd.f32 %v493, %v560
  %562 = vmatmul.f32.gmra.mxu0 %v460
  %v563 = vpop.f32.mrf.mxu0
  %v564 = vadd.f32 %v493, %v563
  %565 = vmatmul.f32.gmra.mxu0 %v461
  %v566 = vpop.f32.mrf.mxu0
  %v567 = vadd.f32 %v493, %v566
  %568 = vmatmul.f32.gmra.mxu0 %v462
  %v569 = vpop.f32.mrf.mxu0
  %v570 = vadd.f32 %v493, %v569
  %571 = vmatmul.f32.gmra.mxu0 %v463
  %v572 = vpop.f32.mrf.mxu0
  %v573 = vadd.f32 %v493, %v572
  %574 = vmatmul.f32.gmra.mxu0 %v464
  %v575 = vpop.f32.mrf.mxu0
  %v576 = vadd.f32 %v493, %v575
  %577 = vmatmul.f32.gmra.mxu0 %v465
  %v578 = vpop.f32.mrf.mxu0
  %v579 = vadd.f32 %v493, %v578
  %580 = vmatmul.f32.gmra.mxu0 %v466
  %v581 = vpop.f32.mrf.mxu0
  %v582 = vadd.f32 %v493, %v581
  %583 = vmatmul.f32.gmra.mxu0 %v467
  %v584 = vpop.f32.mrf.mxu0
  %v585 = vadd.f32 %v493, %v584
  %586 = vmatmul.f32.gmra.mxu0 %v468
  %v587 = vpop.f32.mrf.mxu0
  %v588 = vadd.f32 %v493, %v587
  %589 = vmatmul.f32.gmra.mxu0 %v469
  %v590 = vpop.f32.mrf.mxu0
  %v591 = vadd.f32 %v493, %v590
  %592 = vmatmul.f32.gmra.mxu0 %v470
  %v593 = vpop.f32.mrf.mxu0
  %v594 = vadd.f32 %v493, %v593
  %595 = vmatmul.f32.gmra.mxu0 %v471
  %v596 = vpop.f32.mrf.mxu0
  %v597 = vadd.f32 %v493, %v596
  %598 = vmatmul.f32.gmra.mxu0 %v472
  %v599 = vpop.f32.mrf.mxu0
  %v600 = vadd.f32 %v493, %v599
  %601 = vmatmul.f32.gmra.mxu0 %v473
  %v602 = vpop.f32.mrf.mxu0
  %v603 = vadd.f32 %v493, %v602
  %604 = vmatmul.f32.gmra.mxu0 %v474
  %v605 = vpop.f32.mrf.mxu0
  %v606 = vadd.f32 %v493, %v605
  %607 = vdwg.mxu0
  %608 = vst [vmem:[%s7] sm:$0xff] %v513
  %609 = vst [vmem:[%s7 + $0x8] sm:$0xff] %v516
  %610 = vst [vmem:[%s7 + $0x10] sm:$0xff] %v519
  %611 = vst [vmem:[%s7 + $0x18] sm:$0xff] %v522
  %612 = vst [vmem:[%s7 + $0x20] sm:$0xff] %v525
  %613 = vst [vmem:[%s7 + $0x28] sm:$0xff] %v528
  %614 = vst [vmem:[%s7 + $0x30] sm:$0xff] %v531
  %615 = vst [vmem:[%s7 + $0x38] sm:$0xff] %v534
  %616 = vst [vmem:[%s7 + $0x40] sm:$0xff] %v537
  %617 = vst [vmem:[%s7 + $0x48] sm:$0xff] %v540
  %618 = vst [vmem:[%s7 + $0x50] sm:$0xff] %v543
  %619 = vst [vmem:[%s7 + $0x58] sm:$0xff] %v546
  %620 = vst [vmem:[%s7 + $0x60] sm:$0xff] %v549
  %621 = vst [vmem:[%s7 + $0x68] sm:$0xff] %v552
  %622 = vst [vmem:[%s7 + $0x70] sm:$0xff] %v555
  %623 = vst [vmem:[%s7 + $0x78] sm:$0xff] %v558
  %624 = vst [vmem:[%s7 + $0x80] sm:$0xff] %v561
  %625 = vst [vmem:[%s7 + $0x88] sm:$0xff] %v564
  %626 = vst [vmem:[%s7 + $0x90] sm:$0xff] %v567
  %627 = vst [vmem:[%s7 + $0x98] sm:$0xff] %v570
  %628 = vst [vmem:[%s7 + $0xa0] sm:$0xff] %v573
  %629 = vst [vmem:[%s7 + $0xa8] sm:$0xff] %v576
  %630 = vst [vmem:[%s7 + $0xb0] sm:$0xff] %v579
  %631 = vst [vmem:[%s7 + $0xb8] sm:$0xff] %v582
  %632 = vst [vmem:[%s7 + $0xc0] sm:$0xff] %v585
  %633 = vst [vmem:[%s7 + $0xc8] sm:$0xff] %v588
  %634 = vst [vmem:[%s7 + $0xd0] sm:$0xff] %v591
  %635 = vst [vmem:[%s7 + $0xd8] sm:$0xff] %v594
  %636 = vst [vmem:[%s7 + $0xe0] sm:$0xff] %v597
  %637 = vst [vmem:[%s7 + $0xe8] sm:$0xff] %v600
  %638 = vst [vmem:[%s7 + $0xf0] sm:$0xff] %v603
  %639 = vst [vmem:[%s7 + $0xf8] sm:$0xff] %v606
  // Predicated region
  $region30: #{qnet_forward.1} parent=0 // pred_check
    _
  $region31: #{qnet_forward.1} parent=0 // pred_check_branch
    %641 = sbr.rel (0) target = $region33
  $region32: #{qnet_forward.1} parent=0 // pred_region
    _
  $region33: #{qnet_forward.1} parent=0 // pred_fallthru
    _
  // Predicated region
  $region34: #{qnet_forward.1} parent=0 // pred_check
    _
  $region35: #{qnet_forward.1} parent=0 // pred_check_branch
    %643 = sbr.rel (0) target = $region37
  $region36: #{qnet_forward.1} parent=0 // pred_region
    _
  $region37: #{qnet_forward.1} parent=0 // pred_fallthru
    _

</llo_original>
